<compile_context>
chip_gen: v7x
topology: tpu7x:2x2x1
jax: 0.10.0
libtpu: 0.0.40
codegen_flags: <defaults>
</compile_context>

<pallas_src>
import jax
import jax.numpy as jnp
from jax.experimental import pallas as pl
from jax.experimental.pallas import tpu as pltpu


def _largest_divisor_leq(n: int, cap: int) -> int:
    cap = max(1, min(n, cap))
    for d in range(cap, 0, -1):
        if n % d == 0:
            return d
    return 1


def _pick_seq_tile(S: int, cap: int = 1024) -> int:
    """Largest divisor of S that is <= cap and a multiple of 8 (or S itself).

    Keeps the x-block second-to-last dim legal w.r.t. the (8, 128) tiling rule
    whenever the block is smaller than the full array.
    """
    if S <= cap:
        return S
    for d in range(min(S, cap), 0, -1):
        if S % d == 0 and d % 8 == 0:
            return d
    return S  # no legal sub-tile; fall back to the full sequence


def linear_attention_kernel(x_ref, w1_ref, b1_ref, w2_ref, o_ref, acc_ref):
    # x_ref  : (BB, TS, D)   BB batch elements x TS sequence rows
    # w1_ref : (D, INTER)    linear_1 weight, pre-transposed
    # b1_ref : (1, INTER)    linear_1 bias
    # w2_ref : (INTER, W)    linear_2 weight (no bias), pre-transposed
    # o_ref  : (BB, W, D)    output block (same block across the S grid axis)
    # acc_ref: (BB, W, D)    f32 accumulator scratch
    s_step = pl.program_id(1)

    @pl.when(s_step == 0)
    def _():
        acc_ref[...] = jnp.zeros_like(acc_ref)

    BB, TS, D = x_ref.shape
    W = w2_ref.shape[1]

    x = x_ref[...]                       # keep native dtype (bf16 stays bf16)
    in_dtype = x.dtype
    x2 = x.reshape(BB * TS, D)           # fuse batches into the MXU M dim

    # linear_1 + tanh (f32 accumulation; tanh on the EUP)
    inter = jnp.tanh(
        jnp.dot(x2, w1_ref[...], preferred_element_type=jnp.float32)
        + b1_ref[...].astype(jnp.float32)
    )

    # linear_2 (no bias)
    pre = jnp.dot(
        inter.astype(in_dtype), w2_ref[...], preferred_element_type=jnp.float32
    )  # (BB*TS, W)

    # TODO(synk): optional `mask` argument of the PyTorch forward not wired in
    # (mask=None path only); masking would be a jnp.where on `pre` here.

    # softmax over the weights axis (nn.Softmax(dim=2))
    m = jnp.max(pre, axis=-1, keepdims=True)
    e = jnp.exp(pre - m)
    att = e * pl.reciprocal(jnp.sum(e, axis=-1, keepdims=True), approx=True)
    att3 = att.astype(in_dtype).reshape(BB, TS, W)   # cheap: splits the major dim

    # Batched att^T @ x accumulated over the S tiles: contract on the TS axis,
    # batch over BB.  Single dot_general -> MXU-friendly, no XLU transpose.
    acc_ref[...] += jax.lax.dot_general(
        att3, x,
        dimension_numbers=(((1,), (1,)), ((0,), (0,))),
        preferred_element_type=jnp.float32,
    )

    @pl.when(s_step == pl.num_programs(1) - 1)
    def _():
        o_ref[...] = acc_ref[...].astype(o_ref.dtype)


def linear_attention(x, w1, b1, w2, *, block_b=None, block_s=None):
    """x: (B, S, D); w1: (INTER, D); b1: (INTER,); w2: (W, INTER) — PyTorch layouts."""
    B, S, D = x.shape
    INTER = w1.shape[0]
    W = w2.shape[0]

    # ---- tile selection ---------------------------------------------------
    # Tile S so the x block (+ f32 intermediates) stays well inside VMEM, then
    # fuse batches until the per-step row count (BB*TS) fills a healthy MXU M
    # tile (amortizes per-grid-step overhead when S is small).
    TS = block_s if block_s is not None else _pick_seq_tile(S, 1024)
    if block_b is not None:
        BB = block_b
    else:
        BB = _largest_divisor_leq(B, max(1, min(8, 512 // TS)))
    assert B % BB == 0 and S % TS == 0

    # Glue: weights in matmul-friendly (in, out) layout, 2-D bias, input dtype
    # (keeps bf16 operands going into the MXU when x is bf16).
    w1_t = jnp.transpose(w1).astype(x.dtype)       # (D, INTER)
    b1_2d = b1.reshape(1, INTER).astype(x.dtype)   # (1, INTER)
    w2_t = jnp.transpose(w2).astype(x.dtype)       # (INTER, W)

    # Explicit VMEM budget: v6e defaults to a 32 MiB scoped limit despite
    # 128 MiB physical; v7x has only 64 MiB physical, so clamp there.
    itemsize = x.dtype.itemsize
    vmem_bytes = (
        2 * BB * TS * D * itemsize                        # x block (double-buffered)
        + 2 * BB * W * D * itemsize                       # out block (double-buffered)
        + 2 * (D * INTER + INTER + INTER * W) * itemsize  # weights
        + BB * W * D * 4                                  # f32 accumulator scratch
        + 4 * BB * TS * (INTER + W) * 4                   # f32 intermediates + slack
    )
    vmem_limit = int(min(max(2 * vmem_bytes, 32 * 1024 * 1024), 64 * 1024 * 1024))

    grid = (B // BB, S // TS)

    return pl.pallas_call(
        linear_attention_kernel,
        out_shape=jax.ShapeDtypeStruct((B, W, D), x.dtype),
        grid_spec=pltpu.PrefetchScalarGridSpec(
            num_scalar_prefetch=0,
            grid=grid,
            in_specs=[
                pl.BlockSpec((BB, TS, D), lambda b, s: (b, s, 0)),
                pl.BlockSpec((D, INTER), lambda b, s: (0, 0)),
                pl.BlockSpec((1, INTER), lambda b, s: (0, 0)),
                pl.BlockSpec((INTER, W), lambda b, s: (0, 0)),
            ],
            out_specs=pl.BlockSpec((BB, W, D), lambda b, s: (b, 0, 0)),
            scratch_shapes=[pltpu.VMEM((BB, W, D), jnp.float32)],
        ),
        compiler_params=pltpu.CompilerParams(
            dimension_semantics=("parallel", "arbitrary"),
            vmem_limit_bytes=vmem_limit,
        ),
    )(x, w1_t, b1_2d, w2_t)


def linear_attention_ref(x, w1, b1, w2):
    """Pure-JAX reference mirroring the PyTorch forward (mask=None)."""
    inter = jnp.tanh(jnp.einsum("bsd,id->bsi", x, w1) + b1)
    pre = jnp.einsum("bsi,wi->bsw", inter, w2)
    att = jax.nn.softmax(pre, axis=2)
    att_t = jnp.transpose(att, (0, 2, 1))          # (B, W, S)
    return jnp.einsum("bws,bsd->bwd", att_t, x)    # (B, W, D)


if __name__ == "__main__":
    # Small shapes consistent with the module.
    B, S = 2, 8
    INPUT_SIZE, INTERMEDIATE_SIZE, WEIGHTS_SIZE = 32, 32, 16

    key = jax.random.PRNGKey(0)
    kx, kw1, kb1, kw2 = jax.random.split(key, 4)

    x = jax.random.normal(kx, (B, S, INPUT_SIZE), dtype=jnp.float32)
    # Deterministic parameter init (PyTorch nn.Linear shapes: (out, in)).
    w1 = jax.random.normal(kw1, (INTERMEDIATE_SIZE, INPUT_SIZE), jnp.float32) * 0.1
    b1 = jax.random.normal(kb1, (INTERMEDIATE_SIZE,), jnp.float32) * 0.1
    w2 = jax.random.normal(kw2, (WEIGHTS_SIZE, INTERMEDIATE_SIZE), jnp.float32) * 0.1

    out = jax.block_until_ready(linear_attention(x, w1, b1, w2))
    ref = linear_attention_ref(x, w1, b1, w2)

    assert out.shape == (B, WEIGHTS_SIZE, INPUT_SIZE)
    # approx=True reciprocal in the softmax denominator => ~1e-3 relative error
    # budget on the normalization; outputs are O(1), so 5e-3 gives >3x margin.
    assert jnp.allclose(out, ref, atol=5e-3, rtol=5e-3), "mismatch vs reference"

    print("KERNEL_OK")
</pallas_src>

<mosaic_0001>
module attributes {stable_mosaic.version = 11 : i64} {
  func.func @linear_attention_kernel(%arg0: i32, %arg1: i32, %arg2: memref<2x8x32xf32, #tpu.memory_space<vmem>>, %arg3: memref<32x32xf32, #tpu.memory_space<vmem>>, %arg4: memref<1x32xf32, #tpu.memory_space<vmem>>, %arg5: memref<32x16xf32, #tpu.memory_space<vmem>>, %arg6: memref<2x16x32xf32, #tpu.memory_space<vmem>>, %arg7: memref<2x16x32xf32, #tpu.memory_space<vmem>>) attributes {dimension_semantics = [#tpu.dimension_semantics<parallel>, #tpu.dimension_semantics<arbitrary>], iteration_bounds = array<i64: 1, 1>, scalar_prefetch = 0 : i64, scratch_operands = 1 : i64, tpu.core_type = #tpu.core_type<tc>, window_params = [{transform_indices = @transform_0, window_bounds = array<i64: 2, 8, 32>}, {pipeline_mode = #tpu.pipeline_mode<synchronous>, transform_indices = @transform_1, window_bounds = array<i64: 32, 32>}, {pipeline_mode = #tpu.pipeline_mode<synchronous>, transform_indices = @transform_2, window_bounds = array<i64: 1, 32>}, {pipeline_mode = #tpu.pipeline_mode<synchronous>, transform_indices = @transform_3, window_bounds = array<i64: 32, 16>}, {transform_indices = @transform_4, window_bounds = array<i64: 2, 16, 32>}]} {
    %c0_i32 = arith.constant 0 : i32
    %0 = arith.cmpi eq, %arg1, %c0_i32 : i32
    %1 = arith.extui %0 : i1 to i32
    %c0_i32_0 = arith.constant 0 : i32
    %2 = arith.cmpi ne, %1, %c0_i32_0 : i32
    scf.if %2 {
      %cst_21 = arith.constant 0.000000e+00 : f32
      %31 = vector.broadcast %cst_21 : f32 to vector<2x16x32xf32>
      %c0_22 = arith.constant 0 : index
      %c0_23 = arith.constant 0 : index
      %c0_24 = arith.constant 0 : index
      %32 = vector.load %arg7[%c0_22, %c0_23, %c0_24] : memref<2x16x32xf32, #tpu.memory_space<vmem>>, vector<2x16x32xf32>
      tpu.vector_store %arg7[%c0_22, %c0_23, %c0_24], %31 {strides = array<i32>} : memref<2x16x32xf32, #tpu.memory_space<vmem>>, vector<2x16x32xf32>,
    } else {
    }
    %c0 = arith.constant 0 : index
    %c0_1 = arith.constant 0 : index
    %c0_2 = arith.constant 0 : index
    %3 = vector.load %arg2[%c0, %c0_1, %c0_2] : memref<2x8x32xf32, #tpu.memory_space<vmem>>, vector<2x8x32xf32>
    %4 = vector.shape_cast %3 : vector<2x8x32xf32> to vector<16x32xf32>
    %c0_3 = arith.constant 0 : index
    %c0_4 = arith.constant 0 : index
    %5 = vector.load %arg3[%c0_3, %c0_4] : memref<32x32xf32, #tpu.memory_space<vmem>>, vector<32x32xf32>
    %cst = arith.constant dense<0.000000e+00> : vector<16x32xf32>
    %6 = tpu.matmul %4, %5, %cst {dimension_numbers = #tpu.dot_dimension_numbers<[1], [0], [0], [1], [0, 0, 1, 1], [], []>} : vector<16x32xf32>, vector<32x32xf32>, vector<16x32xf32> -> vector<16x32xf32>
    %c0_5 = arith.constant 0 : index
    %c0_6 = arith.constant 0 : index
    %7 = vector.load %arg4[%c0_5, %c0_6] : memref<1x32xf32, #tpu.memory_space<vmem>>, vector<1x32xf32>
    %8 = vector.broadcast %7 : vector<1x32xf32> to vector<16x32xf32>
    %9 = arith.addf %6, %8 : vector<16x32xf32>
    %10 = math.tanh %9 : vector<16x32xf32>
    %c0_7 = arith.constant 0 : index
    %c0_8 = arith.constant 0 : index
    %11 = vector.load %arg5[%c0_7, %c0_8] : memref<32x16xf32, #tpu.memory_space<vmem>>, vector<32x16xf32>
    %cst_9 = arith.constant dense<0.000000e+00> : vector<16x16xf32>
    %12 = tpu.matmul %10, %11, %cst_9 {dimension_numbers = #tpu.dot_dimension_numbers<[1], [0], [0], [1], [0, 0, 1, 1], [], []>} : vector<16x32xf32>, vector<32x16xf32>, vector<16x16xf32> -> vector<16x16xf32>
    %cst_10 = arith.constant dense<0xFF800000> : vector<16xf32>
    %13 = vector.multi_reduction <maximumf>, %12, %cst_10 [1] : vector<16x16xf32> to vector<16xf32>
    %14 = vector.shape_cast %13 : vector<16xf32> to vector<16x1xf32>
    %15 = vector.broadcast %14 : vector<16x1xf32> to vector<16x16xf32>
    %16 = arith.subf %12, %15 : vector<16x16xf32>
    %17 = math.exp %16 : vector<16x16xf32>
    %cst_11 = arith.constant dense<0.000000e+00> : vector<16xf32>
    %18 = vector.multi_reduction <add>, %17, %cst_11 [1] : vector<16x16xf32> to vector<16xf32>
    %19 = vector.shape_cast %18 : vector<16xf32> to vector<16x1xf32>
    %20 = tpu.reciprocal %19 {approx = true} : vector<16x1xf32> -> vector<16x1xf32>
    %21 = vector.broadcast %20 : vector<16x1xf32> to vector<16x16xf32>
    %22 = arith.mulf %17, %21 : vector<16x16xf32>
    %23 = vector.shape_cast %22 : vector<16x16xf32> to vector<2x8x16xf32>
    %c0_12 = arith.constant 0 : index
    %c0_13 = arith.constant 0 : index
    %c0_14 = arith.constant 0 : index
    %24 = vector.load %arg7[%c0_12, %c0_13, %c0_14] : memref<2x16x32xf32, #tpu.memory_space<vmem>>, vector<2x16x32xf32>
    %cst_15 = arith.constant dense<0.000000e+00> : vector<2x16x32xf32>
    %25 = tpu.matmul %23, %3, %cst_15 {dimension_numbers = #tpu.dot_dimension_numbers<[1], [1], [2], [2], [0, 0, 0, 2, 1, 2], [0], [0]>} : vector<2x8x16xf32>, vector<2x8x32xf32>, vector<2x16x32xf32> -> vector<2x16x32xf32>
    %26 = arith.addf %24, %25 : vector<2x16x32xf32>
    %c0_16 = arith.constant 0 : index
    %c0_17 = arith.constant 0 : index
    %c0_18 = arith.constant 0 : index
    %27 = vector.load %arg7[%c0_16, %c0_17, %c0_18] : memref<2x16x32xf32, #tpu.memory_space<vmem>>, vector<2x16x32xf32>
    tpu.vector_store %arg7[%c0_16, %c0_17, %c0_18], %26 {strides = array<i32>} : memref<2x16x32xf32, #tpu.memory_space<vmem>>, vector<2x16x32xf32>,
    %c0_i32_19 = arith.constant 0 : i32
    %28 = arith.cmpi eq, %arg1, %c0_i32_19 : i32
    %29 = arith.extui %28 : i1 to i32
    %c0_i32_20 = arith.constant 0 : i32
    %30 = arith.cmpi ne, %29, %c0_i32_20 : i32
    scf.if %30 {
      %c0_21 = arith.constant 0 : index
      %c0_22 = arith.constant 0 : index
      %c0_23 = arith.constant 0 : index
      %31 = vector.load %arg7[%c0_21, %c0_22, %c0_23] : memref<2x16x32xf32, #tpu.memory_space<vmem>>, vector<2x16x32xf32>
      %c0_24 = arith.constant 0 : index
      %c0_25 = arith.constant 0 : index
      %c0_26 = arith.constant 0 : index
      %32 = vector.load %arg6[%c0_24, %c0_25, %c0_26] : memref<2x16x32xf32, #tpu.memory_space<vmem>>, vector<2x16x32xf32>
      tpu.vector_store %arg6[%c0_24, %c0_25, %c0_26], %31 {strides = array<i32>} : memref<2x16x32xf32, #tpu.memory_space<vmem>>, vector<2x16x32xf32>,
    } else {
    }
    return
  }
  func.func @transform_0(%arg0: i32, %arg1: i32) -> (i32, i32, i32) {
    %c0_i32 = arith.constant 0 : i32
    %c0_i32_0 = arith.constant 0 : i32
    return %arg0, %arg1, %c0_i32 : i32, i32, i32
  }
  func.func @transform_1(%arg0: i32, %arg1: i32) -> (i32, i32) {
    %c0_i32 = arith.constant 0 : i32
    %c0_i32_0 = arith.constant 0 : i32
    %c0_i32_1 = arith.constant 0 : i32
    return %c0_i32, %c0_i32_0 : i32, i32
  }
  func.func @transform_2(%arg0: i32, %arg1: i32) -> (i32, i32) {
    %c0_i32 = arith.constant 0 : i32
    %c0_i32_0 = arith.constant 0 : i32
    %c0_i32_1 = arith.constant 0 : i32
    return %c0_i32, %c0_i32_0 : i32, i32
  }
  func.func @transform_3(%arg0: i32, %arg1: i32) -> (i32, i32) {
    %c0_i32 = arith.constant 0 : i32
    %c0_i32_0 = arith.constant 0 : i32
    %c0_i32_1 = arith.constant 0 : i32
    return %c0_i32, %c0_i32_0 : i32, i32
  }
  func.func @transform_4(%arg0: i32, %arg1: i32) -> (i32, i32, i32) {
    %c0_i32 = arith.constant 0 : i32
    %c0_i32_0 = arith.constant 0 : i32
    %c0_i32_1 = arith.constant 0 : i32
    return %arg0, %c0_i32, %c0_i32_0 : i32, i32, i32
  }
}

</mosaic_0001>

<llo_original>
// kernel: tpu_custom_call.1
$region0: #{tpu_custom_call.1}
  #allocation0 [shape = 'u32[]', space=smem, size = 0x4, offset = 0x4, fixed_abs, tag = 'smem constant byte address 0x4 - core index']
  #allocation1 [shape = 'u32[144,128]{1,0:T(1,128)}', space=vmem, size = 0x12000, scoped, tag = 'internal scratch']
  #allocation2 [shape = 'f32[2,16,32]{2,1,0:T(8,128)}', space=vmem, size = 0x4000, scoped, tag = 'scratch operand']
  %s0 = inlined_call_operand.vmem [shape: f32[2,8,32], index: 0, kind: input, shape index: {}]
  %s1 = inlined_call_operand.vmem [shape: f32[32,32], index: 1, kind: input, shape index: {}]
  %s2 = inlined_call_operand.vmem [shape: f32[1,32], index: 2, kind: input, shape index: {}]
  %s3 = inlined_call_operand.vmem [shape: f32[32,16], index: 3, kind: input, shape index: {}]
  %s4 = inlined_call_operand.hbm [shape: f32[2,16,32], index: 4, kind: output, shape index: {}]
  %s5 = sld [smem:[#allocation0]]
  $region34: #{tpu_custom_call.1} parent=0
    _
  %s7 = ssub.s32 1, %s5
  %s8 = scalar_select 0, %s7, %s5
  $region1: #{tpu_custom_call.1} parent=0
    #allocation3 [shape = 'u8[16384]{0}', space=vmem, size = 0x4000, scoped, tag = 'output window, operand 0, single buffered']
    #allocation4 [shape = 's32[1]{0}', space=sflag, size = 0x4, scoped, tag = 'scoped memory for tpu_custom_call.1']
    %9 = vsyncpa [#allocation4], 0
    // Predicated region
    $region2: #{tpu_custom_call.1} parent=1 // pred_check
      _
    $region3: #{tpu_custom_call.1} parent=1 // pred_check_branch
      %11 = sbr.rel (0) target = $region5
    $region4: #{tpu_custom_call.1} parent=1 // pred_region
      _
    $region5: #{tpu_custom_call.1} parent=1 // pred_fallthru
      _
    // Predicated region
    $region6: #{tpu_custom_call.1} parent=1 // pred_check
      _
    $region7: #{tpu_custom_call.1} parent=1 // pred_check_branch
      %13 = sbr.rel (0) target = $region9
    $region8: #{tpu_custom_call.1} parent=1 // pred_region
      _
    $region9: #{tpu_custom_call.1} parent=1 // pred_fallthru
      _
    // Predicated region
    $region10: #{tpu_custom_call.1} parent=1 // pred_check
      _
    $region11: #{tpu_custom_call.1} parent=1 // pred_check_branch
      %15 = sbr.rel (0) target = $region13
    $region12: #{tpu_custom_call.1} parent=1 // pred_region
      _
    $region13: #{tpu_custom_call.1} parent=1 // pred_fallthru
      _
    // Predicated region
    $region14: #{tpu_custom_call.1} parent=1 // pred_check
      _
    $region15: #{tpu_custom_call.1} parent=1 // pred_check_branch
      %17 = sbr.rel (0) target = $region17
    $region16: #{tpu_custom_call.1} parent=1 // pred_region
      _
    $region17: #{tpu_custom_call.1} parent=1 // pred_fallthru
      _
    %p18 = scmp.eq.s32.totalorder 0, 0
    // Predicated region
    $region18: #{tpu_custom_call.1} parent=1 // pred_check
      %p19 = pneg %p18
    $region19: #{tpu_custom_call.1} parent=1 // pred_check_branch
      %21 = sbr.rel (%p19) target = $region21
    $region20: #{tpu_custom_call.1} parent=1 // pred_region
      %vm22 = vcmask 261120
      %23 = vst.msk [vmem:[#allocation2] sm:$0xff] %vm22, 0.0
      %24 = vst.msk [vmem:[#allocation2 + $0x8] sm:$0xff] %vm22, 0.0
      %25 = vst.msk [vmem:[#allocation2 + $0x10] sm:$0xff] %vm22, 0.0
      %26 = vst.msk [vmem:[#allocation2 + $0x18] sm:$0xff] %vm22, 0.0
    $region21: #{tpu_custom_call.1} parent=1 // pred_fallthru
      _
    %v27 = vld [vmem:[%s0] sm:$0xff]
    %v28 = vld [vmem:[%s0 + $0x8] sm:$0xff]
    %v29 = vld [vmem:[%s1] sm:$0xff]
    %v30 = vld [vmem:[%s1 + $0x8] sm:$0xff]
    %v31 = vld [vmem:[%s1 + $0x10] sm:$0xff]
    %v32 = vld [vmem:[%s1 + $0x18] sm:$0xff]
    %v33 = vld [vmem:[%s2] sm:$0x1]
    %v35 = vlaneseq
    %v36 = vshrl.u32 %v35, 7
    %v37 = vsub.s32 0, %v36
    %v38 = vrot.slane %v33, %v37
    %vm40 = vcmask 261120
    %v42 = vsel %vm40, %v27, 0
    %v45 = vsel %vm40, %v28, 0
    %47 = vmatprep.subr.mxu0 0.0
    %48 = vmatpush1.msra.mxu0 %v29
    %49 = vmatprep.subr.mxu0 0.0
    %50 = vmatpush1.msra.mxu0 %v30
    %51 = vmatprep.subr.mxu0 0.0
    %52 = vmatpush1.msra.mxu0 %v31
    %53 = vmatprep.subr.mxu0 0.0
    %54 = vmatpush1.msra.mxu0 %v32
    %55 = vmatprep.subr.mxu0 0.0
    %56 = vmatpush1.msra.mxu0 0.0
    %57 = vmatprep.subr.mxu0 0.0
    %58 = vmatpush1.msra.mxu0 0.0
    %59 = vmatprep.subr.mxu0 0.0
    %60 = vmatpush1.msra.mxu0 0.0
    %61 = vmatprep.subr.mxu0 0.0
    %62 = vmatpush1.msra.mxu0 0.0
    %63 = vmatprep.subr.mxu0 0.0
    %64 = vmatpush1.msra.mxu0 0.0
    %65 = vmatprep.subr.mxu0 0.0
    %66 = vmatpush1.msra.mxu0 0.0
    %67 = vmatprep.subr.mxu0 0.0
    %68 = vmatpush1.msra.mxu0 0.0
    %69 = vmatprep.subr.mxu0 0.0
    %70 = vmatpush1.msra.mxu0 0.0
    %71 = vmatprep.subr.mxu0 0.0
    %72 = vmatpush1.msra.mxu0 0.0
    %73 = vmatprep.subr.mxu0 0.0
    %74 = vmatpush1.msra.mxu0 0.0
    %75 = vmatprep.subr.mxu0 0.0
    %76 = vmatpush1.msra.mxu0 0.0
    %77 = vmatprep.subr.mxu0 0.0
    %78 = vmatpush1.msra.mxu0 0.0
    %79 = vmatprep.subr.mxu0 0.0
    %80 = vmatpush1.msra.mxu0 0.0
    %81 = vmatprep.subr.mxu0 0.0
    %82 = vmatpush1.msra.mxu0 0.0
    %83 = vmatprep.subr.mxu0 0.0
    %84 = vmatpush1.msra.mxu0 0.0
    %85 = vmatprep.subr.mxu0 0.0
    %86 = vmatpush1.msra.mxu0 0.0
    %87 = vmatprep.subr.mxu0 0.0
    %88 = vmatpush1.msra.mxu0 0.0
    %89 = vmatprep.subr.mxu0 0.0
    %90 = vmatpush1.msra.mxu0 0.0
    %91 = vmatprep.subr.mxu0 0.0
    %92 = vmatpush1.msra.mxu0 0.0
    %93 = vmatprep.subr.mxu0 0.0
    %94 = vmatpush1.msra.mxu0 0.0
    %95 = vmatprep.subr.mxu0 0.0
    %96 = vmatpush1.msra.mxu0 0.0
    %97 = vmatprep.subr.mxu0 0.0
    %98 = vmatpush1.msra.mxu0 0.0
    %99 = vmatprep.subr.mxu0 0.0
    %100 = vmatpush1.msra.mxu0 0.0
    %101 = vmatprep.subr.mxu0 0.0
    %102 = vmatpush1.msra.mxu0 0.0
    %103 = vmatprep.subr.mxu0 0.0
    %104 = vmatpush1.msra.mxu0 0.0
    %105 = vmatprep.subr.mxu0 0.0
    %106 = vmatpush1.msra.mxu0 0.0
    %107 = vmatprep.subr.mxu0 0.0
    %108 = vmatpush1.msra.mxu0 0.0
    %109 = vmatprep.subr.mxu0 0.0
    %110 = vmatpush1.msra.mxu0 0.0
    %111 = vmatprep.mubr.f32.mxu0 0.0
    %112 = vmatmul.mubr.f32.gmra.mrb[0].mxu0 %v42
    %v113 = vpop.f32.mrb[0].mxu0
    %v114 = vadd.f32 %v38, %v113
    %v115 = vpop.f32.mrb[0].mxu0
    %116 = vmatprep.mubr.f32.mxu0 0.0
    %117 = vmatmul.mubr.f32.gmra.mrb[0].mxu0 %v45
    %v118 = vpop.f32.mrb[0].mxu0
    %v119 = vadd.f32 %v38, %v118
    %v120 = vpop.f32.mrb[0].mxu0
    %121 = vdwg.mxu0
    %v122 = vtanh.pop %v114
    %v123 = vtanh.pop %v119
    %v124 = vld [vmem:[%s3] sm:$0xff]
    %v125 = vld [vmem:[%s3 + $0x8] sm:$0xff]
    %v126 = vld [vmem:[%s3 + $0x10] sm:$0xff]
    %v127 = vld [vmem:[%s3 + $0x18] sm:$0xff]
    %v129 = vsel %vm40, %v122, 0
    %v132 = vsel %vm40, %v123, 0
    %134 = vmatprep.subr.mxu0 0.0
    %135 = vmatpush1.msra.mxu0 %v124
    %136 = vmatprep.subr.mxu0 0.0
    %137 = vmatpush1.msra.mxu0 %v125
    %138 = vmatprep.subr.mxu0 0.0
    %139 = vmatpush1.msra.mxu0 %v126
    %140 = vmatprep.subr.mxu0 0.0
    %141 = vmatpush1.msra.mxu0 %v127
    %142 = vmatprep.subr.mxu0 0.0
    %143 = vmatpush1.msra.mxu0 0.0
    %144 = vmatprep.subr.mxu0 0.0
    %145 = vmatpush1.msra.mxu0 0.0
    %146 = vmatprep.subr.mxu0 0.0
    %147 = vmatpush1.msra.mxu0 0.0
    %148 = vmatprep.subr.mxu0 0.0
    %149 = vmatpush1.msra.mxu0 0.0
    %150 = vmatprep.subr.mxu0 0.0
    %151 = vmatpush1.msra.mxu0 0.0
    %152 = vmatprep.subr.mxu0 0.0
    %153 = vmatpush1.msra.mxu0 0.0
    %154 = vmatprep.subr.mxu0 0.0
    %155 = vmatpush1.msra.mxu0 0.0
    %156 = vmatprep.subr.mxu0 0.0
    %157 = vmatpush1.msra.mxu0 0.0
    %158 = vmatprep.subr.mxu0 0.0
    %159 = vmatpush1.msra.mxu0 0.0
    %160 = vmatprep.subr.mxu0 0.0
    %161 = vmatpush1.msra.mxu0 0.0
    %162 = vmatprep.subr.mxu0 0.0
    %163 = vmatpush1.msra.mxu0 0.0
    %164 = vmatprep.subr.mxu0 0.0
    %165 = vmatpush1.msra.mxu0 0.0
    %166 = vmatprep.subr.mxu0 0.0
    %167 = vmatpush1.msra.mxu0 0.0
    %168 = vmatprep.subr.mxu0 0.0
    %169 = vmatpush1.msra.mxu0 0.0
    %170 = vmatprep.subr.mxu0 0.0
    %171 = vmatpush1.msra.mxu0 0.0
    %172 = vmatprep.subr.mxu0 0.0
    %173 = vmatpush1.msra.mxu0 0.0
    %174 = vmatprep.subr.mxu0 0.0
    %175 = vmatpush1.msra.mxu0 0.0
    %176 = vmatprep.subr.mxu0 0.0
    %177 = vmatpush1.msra.mxu0 0.0
    %178 = vmatprep.subr.mxu0 0.0
    %179 = vmatpush1.msra.mxu0 0.0
    %180 = vmatprep.subr.mxu0 0.0
    %181 = vmatpush1.msra.mxu0 0.0
    %182 = vmatprep.subr.mxu0 0.0
    %183 = vmatpush1.msra.mxu0 0.0
    %184 = vmatprep.subr.mxu0 0.0
    %185 = vmatpush1.msra.mxu0 0.0
    %186 = vmatprep.subr.mxu0 0.0
    %187 = vmatpush1.msra.mxu0 0.0
    %188 = vmatprep.subr.mxu0 0.0
    %189 = vmatpush1.msra.mxu0 0.0
    %190 = vmatprep.subr.mxu0 0.0
    %191 = vmatpush1.msra.mxu0 0.0
    %192 = vmatprep.subr.mxu0 0.0
    %193 = vmatpush1.msra.mxu0 0.0
    %194 = vmatprep.subr.mxu0 0.0
    %195 = vmatpush1.msra.mxu0 0.0
    %196 = vmatprep.subr.mxu0 0.0
    %197 = vmatpush1.msra.mxu0 0.0
    %198 = vmatprep.mubr.f32.mxu0 0.0
    %199 = vmatmul.mubr.f32.gmra.mrb[0].mxu0 %v129
    %v200 = vpop.f32.mrb[0].mxu0
    %v201 = vadd.f32 0.0, %v200
    %v202 = vpop.f32.mrb[0].mxu0
    %203 = vmatprep.mubr.f32.mxu0 0.0
    %204 = vmatmul.mubr.f32.gmra.mrb[0].mxu0 %v132
    %v205 = vpop.f32.mrb[0].mxu0
    %v206 = vadd.f32 0.0, %v205
    %v207 = vpop.f32.mrb[0].mxu0
    %208 = vdwg.mxu0
    %vm209 = vcmask 130048
    %v210 = vsel %vm209, %v201, -inf
    %211 = vmax.xlane.f32.xlu0 %v210
    %v212 = vpop.xlane.xlu0 %211
    %v213 = vsel %vm209, %v206, -inf
    %214 = vmax.xlane.f32.xlu0 %v213
    %v215 = vpop.xlane.xlu0 %214
    %v216 = vsub.f32 %v201, %v212
    %v217 = vsub.f32 %v206, %v215
    %v218 = vmul.f32 %v216, 1.442695
    %v219 = vpow.pop %v218
    %v220 = vmul.f32 %v217, 1.442695
    %v221 = vpow.pop %v220
    %v222 = vsel %vm209, %v219, 0.0
    %223 = vadd.xlane.f32.xlu0 %v222
    %v224 = vpop.xlane.xlu0 %223
    %v225 = vsel %vm209, %v221, 0.0
    %226 = vadd.xlane.f32.xlu0 %v225
    %v227 = vpop.xlane.xlu0 %226
    %v228 = vrcp.pop %v224
    %v229 = vrcp.pop %v227
    %v230 = vmul.f32 %v219, %v228
    %v231 = vmul.f32 %v221, %v229
    %v232 = vld [vmem:[#allocation2] sm:$0xff]
    %v233 = vld [vmem:[#allocation2 + $0x8] sm:$0xff]
    %v234 = vld [vmem:[#allocation2 + $0x10] sm:$0xff]
    %v235 = vld [vmem:[#allocation2 + $0x18] sm:$0xff]
    %236 = vxpose.xlu0.b32.start [1/16] %v230, 128
    %237 = vxpose.xlu0.b32.cont [2/16] 0.0, 128
    %238 = vxpose.xlu0.b32.cont [3/16] 0.0, 128
    %239 = vxpose.xlu0.b32.cont [4/16] 0.0, 128
    %240 = vxpose.xlu0.b32.cont [5/16] 0.0, 128
    %241 = vxpose.xlu0.b32.cont [6/16] 0.0, 128
    %242 = vxpose.xlu0.b32.cont [7/16] 0.0, 128
    %243 = vxpose.xlu0.b32.cont [8/16] 0.0, 128
    %244 = vxpose.xlu0.b32.cont [9/16] 0.0, 128
    %245 = vxpose.xlu0.b32.cont [10/16] 0.0, 128
    %246 = vxpose.xlu0.b32.cont [11/16] 0.0, 128
    %247 = vxpose.xlu0.b32.cont [12/16] 0.0, 128
    %248 = vxpose.xlu0.b32.cont [13/16] 0.0, 128
    %249 = vxpose.xlu0.b32.cont [14/16] 0.0, 128
    %250 = vxpose.xlu0.b32.cont [15/16] 0.0, 128
    %251 = vxpose.xlu0.b32.end [16/16] 0.0, 128
    %v252 = vpop.trf.xlu0
    %v253 = vpop.trf.xlu0
    %v254 = vpop.trf.xlu0
    %v255 = vpop.trf.xlu0
    %v256 = vpop.trf.xlu0
    %v257 = vpop.trf.xlu0
    %v258 = vpop.trf.xlu0
    %v259 = vpop.trf.xlu0
    %v260 = vpop.trf.xlu0
    %v261 = vpop.trf.xlu0
    %v262 = vpop.trf.xlu0
    %v263 = vpop.trf.xlu0
    %v264 = vpop.trf.xlu0
    %v265 = vpop.trf.xlu0
    %v266 = vpop.trf.xlu0
    %v267 = vpop.trf.xlu0
    %vm268 = vcmask 64512
    %v270 = vsel %vm268, %v252, 0
    %v273 = vsel %vm268, %v253, 0
    %275 = vmatprep.subr.mxu0 0.0
    %276 = vmatpush1.msra.mxu0 %v27
    %277 = vmatprep.subr.mxu0 0.0
    %278 = vmatpush1.msra.mxu0 0.0
    %279 = vmatprep.subr.mxu0 0.0
    %280 = vmatpush1.msra.mxu0 0.0
    %281 = vmatprep.subr.mxu0 0.0
    %282 = vmatpush1.msra.mxu0 0.0
    %283 = vmatprep.subr.mxu0 0.0
    %284 = vmatpush1.msra.mxu0 0.0
    %285 = vmatprep.subr.mxu0 0.0
    %286 = vmatpush1.msra.mxu0 0.0
    %287 = vmatprep.subr.mxu0 0.0
    %288 = vmatpush1.msra.mxu0 0.0
    %289 = vmatprep.subr.mxu0 0.0
    %290 = vmatpush1.msra.mxu0 0.0
    %291 = vmatprep.subr.mxu0 0.0
    %292 = vmatpush1.msra.mxu0 0.0
    %293 = vmatprep.subr.mxu0 0.0
    %294 = vmatpush1.msra.mxu0 0.0
    %295 = vmatprep.subr.mxu0 0.0
    %296 = vmatpush1.msra.mxu0 0.0
    %297 = vmatprep.subr.mxu0 0.0
    %298 = vmatpush1.msra.mxu0 0.0
    %299 = vmatprep.subr.mxu0 0.0
    %300 = vmatpush1.msra.mxu0 0.0
    %301 = vmatprep.subr.mxu0 0.0
    %302 = vmatpush1.msra.mxu0 0.0
    %303 = vmatprep.subr.mxu0 0.0
    %304 = vmatpush1.msra.mxu0 0.0
    %305 = vmatprep.subr.mxu0 0.0
    %306 = vmatpush1.msra.mxu0 0.0
    %307 = vmatprep.subr.mxu0 0.0
    %308 = vmatpush1.msra.mxu0 0.0
    %309 = vmatprep.subr.mxu0 0.0
    %310 = vmatpush1.msra.mxu0 0.0
    %311 = vmatprep.subr.mxu0 0.0
    %312 = vmatpush1.msra.mxu0 0.0
    %313 = vmatprep.subr.mxu0 0.0
    %314 = vmatpush1.msra.mxu0 0.0
    %315 = vmatprep.subr.mxu0 0.0
    %316 = vmatpush1.msra.mxu0 0.0
    %317 = vmatprep.subr.mxu0 0.0
    %318 = vmatpush1.msra.mxu0 0.0
    %319 = vmatprep.subr.mxu0 0.0
    %320 = vmatpush1.msra.mxu0 0.0
    %321 = vmatprep.subr.mxu0 0.0
    %322 = vmatpush1.msra.mxu0 0.0
    %323 = vmatprep.subr.mxu0 0.0
    %324 = vmatpush1.msra.mxu0 0.0
    %325 = vmatprep.subr.mxu0 0.0
    %326 = vmatpush1.msra.mxu0 0.0
    %327 = vmatprep.subr.mxu0 0.0
    %328 = vmatpush1.msra.mxu0 0.0
    %329 = vmatprep.subr.mxu0 0.0
    %330 = vmatpush1.msra.mxu0 0.0
    %331 = vmatprep.subr.mxu0 0.0
    %332 = vmatpush1.msra.mxu0 0.0
    %333 = vmatprep.subr.mxu0 0.0
    %334 = vmatpush1.msra.mxu0 0.0
    %335 = vmatprep.subr.mxu0 0.0
    %336 = vmatpush1.msra.mxu0 0.0
    %337 = vmatprep.subr.mxu0 0.0
    %338 = vmatpush1.msra.mxu0 0.0
    %339 = vmatprep.mubr.f32.mxu0 0.0
    %340 = vmatmul.mubr.f32.gmra.mrb[0].mxu0 %v270
    %v341 = vpop.f32.mrb[0].mxu0
    %v342 = vadd.f32 0.0, %v341
    %v343 = vpop.f32.mrb[0].mxu0
    %344 = vmatprep.mubr.f32.mxu0 0.0
    %345 = vmatmul.mubr.f32.gmra.mrb[0].mxu0 %v273
    %v346 = vpop.f32.mrb[0].mxu0
    %v347 = vadd.f32 0.0, %v346
    %v348 = vpop.f32.mrb[0].mxu0
    %349 = vdwg.mxu0
    %350 = vxpose.xlu0.b32.start [1/16] %v231, 128
    %351 = vxpose.xlu0.b32.cont [2/16] 0.0, 128
    %352 = vxpose.xlu0.b32.cont [3/16] 0.0, 128
    %353 = vxpose.xlu0.b32.cont [4/16] 0.0, 128
    %354 = vxpose.xlu0.b32.cont [5/16] 0.0, 128
    %355 = vxpose.xlu0.b32.cont [6/16] 0.0, 128
    %356 = vxpose.xlu0.b32.cont [7/16] 0.0, 128
    %357 = vxpose.xlu0.b32.cont [8/16] 0.0, 128
    %358 = vxpose.xlu0.b32.cont [9/16] 0.0, 128
    %359 = vxpose.xlu0.b32.cont [10/16] 0.0, 128
    %360 = vxpose.xlu0.b32.cont [11/16] 0.0, 128
    %361 = vxpose.xlu0.b32.cont [12/16] 0.0, 128
    %362 = vxpose.xlu0.b32.cont [13/16] 0.0, 128
    %363 = vxpose.xlu0.b32.cont [14/16] 0.0, 128
    %364 = vxpose.xlu0.b32.cont [15/16] 0.0, 128
    %365 = vxpose.xlu0.b32.end [16/16] 0.0, 128
    %v366 = vpop.trf.xlu0
    %v367 = vpop.trf.xlu0
    %v368 = vpop.trf.xlu0
    %v369 = vpop.trf.xlu0
    %v370 = vpop.trf.xlu0
    %v371 = vpop.trf.xlu0
    %v372 = vpop.trf.xlu0
    %v373 = vpop.trf.xlu0
    %v374 = vpop.trf.xlu0
    %v375 = vpop.trf.xlu0
    %v376 = vpop.trf.xlu0
    %v377 = vpop.trf.xlu0
    %v378 = vpop.trf.xlu0
    %v379 = vpop.trf.xlu0
    %v380 = vpop.trf.xlu0
    %v381 = vpop.trf.xlu0
    %v383 = vsel %vm268, %v366, 0
    %v386 = vsel %vm268, %v367, 0
    %388 = vmatprep.subr.mxu0 0.0
    %389 = vmatpush1.msra.mxu0 %v28
    %390 = vmatprep.subr.mxu0 0.0
    %391 = vmatpush1.msra.mxu0 0.0
    %392 = vmatprep.subr.mxu0 0.0
    %393 = vmatpush1.msra.mxu0 0.0
    %394 = vmatprep.subr.mxu0 0.0
    %395 = vmatpush1.msra.mxu0 0.0
    %396 = vmatprep.subr.mxu0 0.0
    %397 = vmatpush1.msra.mxu0 0.0
    %398 = vmatprep.subr.mxu0 0.0
    %399 = vmatpush1.msra.mxu0 0.0
    %400 = vmatprep.subr.mxu0 0.0
    %401 = vmatpush1.msra.mxu0 0.0
    %402 = vmatprep.subr.mxu0 0.0
    %403 = vmatpush1.msra.mxu0 0.0
    %404 = vmatprep.subr.mxu0 0.0
    %405 = vmatpush1.msra.mxu0 0.0
    %406 = vmatprep.subr.mxu0 0.0
    %407 = vmatpush1.msra.mxu0 0.0
    %408 = vmatprep.subr.mxu0 0.0
    %409 = vmatpush1.msra.mxu0 0.0
    %410 = vmatprep.subr.mxu0 0.0
    %411 = vmatpush1.msra.mxu0 0.0
    %412 = vmatprep.subr.mxu0 0.0
    %413 = vmatpush1.msra.mxu0 0.0
    %414 = vmatprep.subr.mxu0 0.0
    %415 = vmatpush1.msra.mxu0 0.0
    %416 = vmatprep.subr.mxu0 0.0
    %417 = vmatpush1.msra.mxu0 0.0
    %418 = vmatprep.subr.mxu0 0.0
    %419 = vmatpush1.msra.mxu0 0.0
    %420 = vmatprep.subr.mxu0 0.0
    %421 = vmatpush1.msra.mxu0 0.0
    %422 = vmatprep.subr.mxu0 0.0
    %423 = vmatpush1.msra.mxu0 0.0
    %424 = vmatprep.subr.mxu0 0.0
    %425 = vmatpush1.msra.mxu0 0.0
    %426 = vmatprep.subr.mxu0 0.0
    %427 = vmatpush1.msra.mxu0 0.0
    %428 = vmatprep.subr.mxu0 0.0
    %429 = vmatpush1.msra.mxu0 0.0
    %430 = vmatprep.subr.mxu0 0.0
    %431 = vmatpush1.msra.mxu0 0.0
    %432 = vmatprep.subr.mxu0 0.0
    %433 = vmatpush1.msra.mxu0 0.0
    %434 = vmatprep.subr.mxu0 0.0
    %435 = vmatpush1.msra.mxu0 0.0
    %436 = vmatprep.subr.mxu0 0.0
    %437 = vmatpush1.msra.mxu0 0.0
    %438 = vmatprep.subr.mxu0 0.0
    %439 = vmatpush1.msra.mxu0 0.0
    %440 = vmatprep.subr.mxu0 0.0
    %441 = vmatpush1.msra.mxu0 0.0
    %442 = vmatprep.subr.mxu0 0.0
    %443 = vmatpush1.msra.mxu0 0.0
    %444 = vmatprep.subr.mxu0 0.0
    %445 = vmatpush1.msra.mxu0 0.0
    %446 = vmatprep.subr.mxu0 0.0
    %447 = vmatpush1.msra.mxu0 0.0
    %448 = vmatprep.subr.mxu0 0.0
    %449 = vmatpush1.msra.mxu0 0.0
    %450 = vmatprep.subr.mxu0 0.0
    %451 = vmatpush1.msra.mxu0 0.0
    %452 = vmatprep.mubr.f32.mxu0 0.0
    %453 = vmatmul.mubr.f32.gmra.mrb[0].mxu0 %v383
    %v454 = vpop.f32.mrb[0].mxu0
    %v455 = vadd.f32 0.0, %v454
    %v456 = vpop.f32.mrb[0].mxu0
    %457 = vmatprep.mubr.f32.mxu0 0.0
    %458 = vmatmul.mubr.f32.gmra.mrb[0].mxu0 %v386
    %v459 = vpop.f32.mrb[0].mxu0
    %v460 = vadd.f32 0.0, %v459
    %v461 = vpop.f32.mrb[0].mxu0
    %462 = vdwg.mxu0
    %v463 = vadd.f32 %v232, %v342
    %v464 = vadd.f32 %v233, %v347
    %v465 = vadd.f32 %v234, %v455
    %v466 = vadd.f32 %v235, %v460
    %467 = vst.msk [vmem:[#allocation2] sm:$0xff] %vm40, %v463
    %468 = vst.msk [vmem:[#allocation2 + $0x8] sm:$0xff] %vm40, %v464
    %469 = vst.msk [vmem:[#allocation2 + $0x10] sm:$0xff] %vm40, %v465
    %470 = vst.msk [vmem:[#allocation2 + $0x18] sm:$0xff] %vm40, %v466
    // Predicated region
    $region22: #{tpu_custom_call.1} parent=1 // pred_check
      %p471 = pneg %p18
    $region23: #{tpu_custom_call.1} parent=1 // pred_check_branch
      %473 = sbr.rel (%p471) target = $region25
    $region24: #{tpu_custom_call.1} parent=1 // pred_region
      %v474 = vld [vmem:[#allocation2] sm:$0xff]
      %v475 = vld [vmem:[#allocation2 + $0x8] sm:$0xff]
      %v476 = vld [vmem:[#allocation2 + $0x10] sm:$0xff]
      %v477 = vld [vmem:[#allocation2 + $0x18] sm:$0xff]
      %478 = vst.msk [vmem:[#allocation3] sm:$0xff] %vm40, %v474
      %479 = vst.msk [vmem:[#allocation3 + $0x8] sm:$0xff] %vm40, %v475
      %480 = vst.msk [vmem:[#allocation3 + $0x10] sm:$0xff] %vm40, %v476
      %481 = vst.msk [vmem:[#allocation3 + $0x18] sm:$0xff] %vm40, %v477
    $region25: #{tpu_custom_call.1} parent=1 // pred_fallthru
      _
    // Predicated region
    $region26: #{tpu_custom_call.1} parent=1 // pred_check
      _
    $region27: #{tpu_custom_call.1} parent=1 // pred_check_branch
      %483 = sbr.rel (0) target = $region29
    $region28: #{tpu_custom_call.1} parent=1 // pred_region
      %s485 = ssub.s32 512, 512
      %486 = vsyncadd [#allocation4], %s485
      %s487 = sshll.u32 [#allocation3], 4
      %s488 = int_to_ptr.vmem [resolvable:$true] %s487
      %493 = dma.vmem_to_hbm [thread:$0]  %s488, 512, %s4, [#allocation4], 128, 128, 8
    $region29: #{tpu_custom_call.1} parent=1 // pred_fallthru
      _
    // Predicated region
    $region30: #{tpu_custom_call.1} parent=1 // pred_check
      _
    $region31: #{tpu_custom_call.1} parent=1 // pred_check_branch
      %495 = sbr.rel (0) target = $region33
    $region32: #{tpu_custom_call.1} parent=1 // pred_region
      %496 = dma.done [#allocation4], 512
    $region33: #{tpu_custom_call.1} parent=1 // pred_fallthru
      _
    %497 = vsyncpa [#allocation4], 1

</llo_original>
